<compile_context>
chip_gen: v7x
topology: tpu7x:2x2x1
jax: 0.10.0
libtpu: 0.0.40
codegen_flags: <defaults>
</compile_context>

<pallas_src>
import functools

import jax
import jax.numpy as jnp
from jax import lax
from jax.experimental import pallas as pl
from jax.experimental.pallas import tpu as pltpu


# ------------------- kernel 1: per-metapath projection -----------------------
def _proj_kernel(h_ref, w_ref, alt_ref, arm_ref, feat_ref, el_ref, er_ref):
    """feat = h @ W ; src scores el in (H, N) row layout ; dst scores er (N, H)."""
    h = h_ref[...]                                     # (N, F_in)      f32
    W = w_ref[0]                                       # (F_in, D_pad)  f32
    feat = jnp.dot(h, W, preferred_element_type=jnp.float32)        # (N, D_pad)
    feat_ref[0] = feat.astype(jnp.bfloat16)            # bf16 operand for the MXU

    # el[h, n] = sum_f feat[n, h*F+f] * attn_l[h, f]  -- one NT matmul, already
    # laid out as lane rows so the N^2 kernel never transposes.
    el_ref[0] = lax.dot_general(
        alt_ref[0], feat,
        dimension_numbers=(((1,), (1,)), ((), ())),
        preferred_element_type=jnp.float32)            # (H, N)
    # er[n, h] = sum_f feat[n, h*F+f] * attn_r[h, f]
    er_ref[0] = jnp.dot(feat, arm_ref[0],
                        preferred_element_type=jnp.float32)          # (N, H)


# --------- kernel 2: edge softmax + aggregation + fused semantic score -------
def _gat_kernel(adj_ref, feat_ref, el_ref, er_ref, bias_ref,
                w1_ref, b1_ref, w2_ref, z_ref, score_ref,
                *, num_heads, out_feats, d_pad, neg_slope):
    tile = adj_ref.shape[1]
    adj_f = adj_ref[0].astype(jnp.float32)             # (TILE, N)  0/1
    edge_bias = (adj_f - 1.0) * 1e30                   # 0 on edges, -1e30 else
    feat = feat_ref[0]                                  # (N, D_pad) bf16 (src)
    el = el_ref[0]                                      # (H, N)     f32  (src)
    er = er_ref[0]                                      # (TILE, H)  f32  (dst)

    d_true = num_heads * out_feats
    head_outs = []
    for hd in range(num_heads):
        e = er[:, hd:hd + 1] + el[hd:hd + 1, :]         # (TILE, N)
        e = jnp.where(e > 0.0, e, neg_slope * e)        # LeakyReLU(0.2)
        e = e + edge_bias                               # mask non-edges
        e_max = jnp.max(e, axis=-1, keepdims=True)
        p = jnp.exp(e - e_max)                          # non-edges underflow to 0
        denom = jnp.sum(p, axis=-1, keepdims=True)
        inv = pl.reciprocal(jnp.maximum(denom, 1e-30), approx=True)   # (TILE, 1)
        f_h = feat[:, hd * out_feats:(hd + 1) * out_feats]            # (N, F) bf16
        o_h = jnp.dot(p.astype(jnp.bfloat16), f_h,
                      preferred_element_type=jnp.float32)             # (TILE, F)
        head_outs.append(o_h * inv)                     # divide -> post-mm scale

    if d_pad > d_true:                                  # lane-dense output slab
        head_outs.append(jnp.zeros((tile, d_pad - d_true), jnp.float32))
    rst = jnp.concatenate(head_outs, axis=-1) + bias_ref[0]           # (TILE, D_pad)
    z = jnp.where(rst > 0.0, rst, jnp.exp(rst) - 1.0)                 # ELU
    z_ref[0] = z                                        # one unmasked store

    # fused SemanticAttention score: sum over this tile's rows of tanh(z@W1+b1)@w2
    proj = jnp.tanh(jnp.dot(z.astype(jnp.bfloat16), w1_ref[...],
                            preferred_element_type=jnp.float32) + b1_ref[...])
    colsum = jnp.sum(proj, axis=0, keepdims=True)       # (1, HID)
    part = jnp.sum(colsum * w2_ref[...])                # scalar partial sum
    score_ref[...] = jnp.zeros((1, 1, 8, 128), jnp.float32) + part


# -------------- kernel 3: beta-weighted sum over metapaths -------------------
def _wsum_kernel(beta_ref, z_ref, out_ref, *, num_paths):
    acc = beta_ref[0] * z_ref[0]                        # (1,1) * (TILE, D_pad)
    for m in range(1, num_paths):
        acc = acc + beta_ref[m] * z_ref[m]
    out_ref[...] = acc


# ------------------------------- wrapper --------------------------------------
def han_layer_forward(adj, h, gat_w, attn_l, attn_r, gat_bias,
                      sem_w1, sem_b1, sem_w2, *,
                      num_heads, out_feats, neg_slope=0.2,
                      tile_dst=128, tile_nodes=128):
    M, N, _ = adj.shape
    f_in = h.shape[1]
    D = num_heads * out_feats
    D_pad = ((D + 127) // 128) * 128                    # lane-dense width
    HID = sem_w1.shape[1]

    if N % tile_dst != 0:                               # small / irregular N
        tile_dst = N
    if N % tile_nodes != 0:
        tile_nodes = N
    T = N // tile_dst

    # int8 adjacency (ideally already produced upstream as int8)
    adj_i8 = adj if adj.dtype == jnp.int8 else (adj != 0).astype(jnp.int8)

    # zero-pad weights / bias to D_pad lanes (padded z columns stay exactly 0)
    w_pad = jnp.zeros((M, f_in, D_pad), jnp.float32).at[:, :, :D].set(gat_w)
    bias_pad = jnp.zeros((M, 1, D_pad), jnp.float32).at[:, :, :D].set(
        gat_bias.reshape(M, 1, D))
    w1_bf16 = jnp.zeros((D_pad, HID), jnp.float32).at[:D, :].set(
        sem_w1).astype(jnp.bfloat16)
    b1 = sem_b1.reshape(1, HID).astype(jnp.float32)
    w2_row = sem_w2.reshape(1, HID).astype(jnp.float32)

    # block-diagonal head selectors -> all head scores with one MXU matmul each
    al_t = jnp.zeros((M, num_heads, D_pad), jnp.float32)      # (M, H, D_pad)
    ar_mat = jnp.zeros((M, D_pad, num_heads), jnp.float32)    # (M, D_pad, H)
    for hd in range(num_heads):
        sl = slice(hd * out_feats, (hd + 1) * out_feats)
        al_t = al_t.at[:, hd, sl].set(attn_l[:, hd, :])
        ar_mat = ar_mat.at[:, sl, hd].set(attn_r[:, hd, :])

    # ---- kernel 1: projection + attention scores (once per metapath) --------
    feat_pad, el_rows, er_cols = pl.pallas_call(
        _proj_kernel,
        out_shape=(jax.ShapeDtypeStruct((M, N, D_pad), jnp.bfloat16),
                   jax.ShapeDtypeStruct((M, num_heads, N), jnp.float32),
                   jax.ShapeDtypeStruct((M, N, num_heads), jnp.float32)),
        grid=(M,),
        in_specs=[
            pl.BlockSpec((N, f_in), lambda m: (0, 0)),
            pl.BlockSpec((1, f_in, D_pad), lambda m: (m, 0, 0)),
            pl.BlockSpec((1, num_heads, D_pad), lambda m: (m, 0, 0)),
            pl.BlockSpec((1, D_pad, num_heads), lambda m: (m, 0, 0)),
        ],
        out_specs=(
            pl.BlockSpec((1, N, D_pad), lambda m: (m, 0, 0)),
            pl.BlockSpec((1, num_heads, N), lambda m: (m, 0, 0)),
            pl.BlockSpec((1, N, num_heads), lambda m: (m, 0, 0)),
        ),
        compiler_params=pltpu.CompilerParams(
            dimension_semantics=("parallel",)),
    )(h.astype(jnp.float32), w_pad, al_t, ar_mat)

    # ---- kernel 2: tiled edge softmax + aggregation + fused semantic score --
    gat_cost = pl.CostEstimate(
        flops=int(2 * M * N * N * (D + num_heads) + 2 * M * N * D_pad * HID),
        transcendentals=int(M * N * N * num_heads + M * N * (D_pad + HID)),
        bytes_accessed=int(M * N * N                     # int8 adjacency
                           + M * N * D_pad * (2 + 4)     # feat read + z write
                           + M * N * num_heads * 8),
    )
    z_pad, score_part = pl.pallas_call(
        functools.partial(_gat_kernel, num_heads=num_heads,
                          out_feats=out_feats, d_pad=D_pad,
                          neg_slope=neg_slope),
        out_shape=(jax.ShapeDtypeStruct((M, N, D_pad), jnp.float32),
                   jax.ShapeDtypeStruct((M, T, 8, 128), jnp.float32)),
        grid=(M, T),
        in_specs=[
            pl.BlockSpec((1, tile_dst, N), lambda m, t: (m, t, 0)),          # adj
            pl.BlockSpec((1, N, D_pad), lambda m, t: (m, 0, 0)),             # feat
            pl.BlockSpec((1, num_heads, N), lambda m, t: (m, 0, 0)),         # el
            pl.BlockSpec((1, tile_dst, num_heads), lambda m, t: (m, t, 0)),  # er
            pl.BlockSpec((1, 1, D_pad), lambda m, t: (m, 0, 0)),             # bias
            pl.BlockSpec((D_pad, HID), lambda m, t: (0, 0)),                 # sem W1
            pl.BlockSpec((1, HID), lambda m, t: (0, 0)),                     # sem b1
            pl.BlockSpec((1, HID), lambda m, t: (0, 0)),                     # sem w2
        ],
        out_specs=(
            pl.BlockSpec((1, tile_dst, D_pad), lambda m, t: (m, t, 0)),
            pl.BlockSpec((1, 1, 8, 128), lambda m, t: (m, t, 0, 0)),
        ),
        compiler_params=pltpu.CompilerParams(
            dimension_semantics=("parallel", "parallel"),
            # Tune tile_dst per generation so 2*adj_tile + resident feat + the
            # per-head (TILE, N) temporaries stay under the limit (v7x: 64 MiB
            # physical VMEM; v5e/v6e can raise this and double tile_dst).
            vmem_limit_bytes=32 * 1024 * 1024),
        cost_estimate=gat_cost,
    )(adj_i8, feat_pad, el_rows, er_cols, bias_pad, w1_bf16, b1, w2_row)

    # ---- metapath softmax over M scalars -------------------------------------
    w = jnp.sum(score_part[:, :, 0, 0], axis=1) / N       # mean over nodes, (M,)
    beta = jax.nn.softmax(w)                              # (M,)
    beta3 = beta.reshape(M, 1, 1)

    # ---- kernel 3: beta-weighted sum over metapaths, tiled over nodes --------
    out_pad = pl.pallas_call(
        functools.partial(_wsum_kernel, num_paths=M),
        out_shape=jax.ShapeDtypeStruct((N, D_pad), jnp.float32),
        grid=(N // tile_nodes,),
        in_specs=[
            pl.BlockSpec((M, 1, 1), lambda t: (0, 0, 0)),
            pl.BlockSpec((M, tile_nodes, D_pad), lambda t: (0, t, 0)),
        ],
        out_specs=pl.BlockSpec((tile_nodes, D_pad), lambda t: (t, 0)),
        compiler_params=pltpu.CompilerParams(
            dimension_semantics=("parallel",)),
        cost_estimate=pl.CostEstimate(
            flops=int(2 * M * N * D_pad), transcendentals=0,
            bytes_accessed=int((M + 1) * N * D_pad * 4)),
    )(beta3, z_pad)

    return out_pad[:, :D]


# --------------------------- pure-JAX reference ------------------------------
def _reference(adj, h, gat_w, attn_l, attn_r, gat_bias,
               sem_w1, sem_b1, sem_w2, num_heads, out_feats):
    M, N, _ = adj.shape
    D = num_heads * out_feats
    embs = []
    for m in range(M):
        feat = h @ gat_w[m]
        feat3 = feat.reshape(N, num_heads, out_feats)
        el = jnp.sum(feat3 * attn_l[m][None], axis=-1)    # (N, H) src
        er = jnp.sum(feat3 * attn_r[m][None], axis=-1)    # (N, H) dst
        e = er[:, None, :] + el[None, :, :]               # (dst, src, H)
        e = jnp.where(e > 0, e, 0.2 * e)
        mask = (adj[m] != 0)[:, :, None]
        e = jnp.where(mask, e, -1e30)
        p = jax.nn.softmax(e, axis=1)
        out = jnp.einsum('dsh,shf->dhf', p, feat3).reshape(N, D) + gat_bias[m]
        out = jnp.where(out > 0, out, jnp.exp(out) - 1.0)
        embs.append(out)
    z = jnp.stack(embs, axis=1)                           # (N, M, D) like torch
    wscore = jnp.mean(jnp.tanh(z @ sem_w1 + sem_b1) @ sem_w2, axis=0)  # (M, 1)
    beta = jax.nn.softmax(wscore, axis=0)
    return jnp.sum(beta[None, :, :] * z, axis=1)          # (N, D)


if __name__ == "__main__":
    # HANLayer(num_meta_paths=3, in_size=16, out_size=8, layer_num_heads=4)
    M, N = 3, 256
    in_size, out_size, heads = 16, 8, 4
    hidden = 128
    D = heads * out_size

    keys = jax.random.split(jax.random.PRNGKey(0), 10)
    adj_bool = (jax.random.bernoulli(keys[0], 0.15, (M, N, N)) |
                jnp.eye(N, dtype=bool)[None])             # self-loops
    adj = adj_bool.astype(jnp.int8)                       # dense int8 adjacency
    h = jax.random.normal(keys[1], (N, in_size), jnp.float32)
    gat_w = jax.random.normal(keys[2], (M, in_size, D), jnp.float32) * 0.2
    attn_l = jax.random.normal(keys[3], (M, heads, out_size), jnp.float32) * 0.2
    attn_r = jax.random.normal(keys[4], (M, heads, out_size), jnp.float32) * 0.2
    gat_bias = jax.random.normal(keys[5], (M, D), jnp.float32) * 0.1
    sem_w1 = jax.random.normal(keys[6], (D, hidden), jnp.float32) * 0.1
    sem_b1 = jax.random.normal(keys[7], (hidden,), jnp.float32) * 0.1
    sem_w2 = jax.random.normal(keys[8], (hidden, 1), jnp.float32) * 0.1

    out = han_layer_forward(adj, h, gat_w, attn_l, attn_r, gat_bias,
                            sem_w1, sem_b1, sem_w2,
                            num_heads=heads, out_feats=out_size)
    out = jax.block_until_ready(out)

    ref = _reference(adj, h, gat_w, attn_l, attn_r, gat_bias,
                     sem_w1, sem_b1, sem_w2, heads, out_size)
    ref = jax.block_until_ready(ref)

    assert out.shape == (N, D), out.shape
    assert bool(jnp.all(jnp.isfinite(out)))
    err = float(jnp.max(jnp.abs(out - ref)))
    # bf16 MXU operands + approx reciprocal -> small numeric drift vs f32 ref
    assert bool(jnp.allclose(out, ref, rtol=2e-2, atol=2e-2)), err
    print("KERNEL_OK")
</pallas_src>

<mosaic_0001>
module attributes {stable_mosaic.version = 11 : i64} {
  func.func @_proj_kernel(%arg0: i32, %arg1: memref<256x16xf32, #tpu.memory_space<vmem>>, %arg2: memref<1x16x128xf32, #tpu.memory_space<vmem>>, %arg3: memref<1x4x128xf32, #tpu.memory_space<vmem>>, %arg4: memref<1x128x4xf32, #tpu.memory_space<vmem>>, %arg5: memref<1x256x128xbf16, #tpu.memory_space<vmem>>, %arg6: memref<1x4x256xf32, #tpu.memory_space<vmem>>, %arg7: memref<1x256x4xf32, #tpu.memory_space<vmem>>) attributes {dimension_semantics = [#tpu.dimension_semantics<parallel>], iteration_bounds = array<i64: 3>, scalar_prefetch = 0 : i64, scratch_operands = 0 : i64, tpu.core_type = #tpu.core_type<tc>, window_params = [{pipeline_mode = #tpu.pipeline_mode<synchronous>, transform_indices = @transform_0, window_bounds = array<i64: 256, 16>}, {transform_indices = @transform_1, window_bounds = array<i64: 1, 16, 128>}, {transform_indices = @transform_2, window_bounds = array<i64: 1, 4, 128>}, {transform_indices = @transform_3, window_bounds = array<i64: 1, 128, 4>}, {transform_indices = @transform_4, window_bounds = array<i64: 1, 256, 128>}, {transform_indices = @transform_5, window_bounds = array<i64: 1, 4, 256>}, {transform_indices = @transform_6, window_bounds = array<i64: 1, 256, 4>}]} {
    %c0 = arith.constant 0 : index
    %c0_0 = arith.constant 0 : index
    %0 = vector.load %arg1[%c0, %c0_0] : memref<256x16xf32, #tpu.memory_space<vmem>>, vector<256x16xf32>
    %c0_1 = arith.constant 0 : index
    %c0_2 = arith.constant 0 : index
    %c0_3 = arith.constant 0 : index
    %1 = vector.load %arg2[%c0_1, %c0_2, %c0_3] : memref<1x16x128xf32, #tpu.memory_space<vmem>>, vector<1x16x128xf32>
    %2 = vector.shape_cast %1 : vector<1x16x128xf32> to vector<16x128xf32>
    %cst = arith.constant dense<0.000000e+00> : vector<256x128xf32>
    %3 = tpu.matmul %0, %2, %cst {dimension_numbers = #tpu.dot_dimension_numbers<[1], [0], [0], [1], [0, 0, 1, 1], [], []>} : vector<256x16xf32>, vector<16x128xf32>, vector<256x128xf32> -> vector<256x128xf32>
    %4 = arith.truncf %3 : vector<256x128xf32> to vector<256x128xbf16>
    %c0_4 = arith.constant 0 : index
    %c0_5 = arith.constant 0 : index
    %c0_6 = arith.constant 0 : index
    %5 = vector.load %arg5[%c0_4, %c0_5, %c0_6] : memref<1x256x128xbf16, #tpu.memory_space<vmem>>, vector<1x256x128xbf16>
    %6 = vector.shape_cast %5 : vector<1x256x128xbf16> to vector<256x128xbf16>
    %7 = vector.shape_cast %4 : vector<256x128xbf16> to vector<1x256x128xbf16>
    tpu.vector_store %arg5[%c0_4, %c0_5, %c0_6], %7 {strides = array<i32>} : memref<1x256x128xbf16, #tpu.memory_space<vmem>>, vector<1x256x128xbf16>,
    %c0_7 = arith.constant 0 : index
    %c0_8 = arith.constant 0 : index
    %c0_9 = arith.constant 0 : index
    %8 = vector.load %arg3[%c0_7, %c0_8, %c0_9] : memref<1x4x128xf32, #tpu.memory_space<vmem>>, vector<1x4x128xf32>
    %9 = vector.shape_cast %8 : vector<1x4x128xf32> to vector<4x128xf32>
    %cst_10 = arith.constant dense<0.000000e+00> : vector<4x256xf32>
    %10 = tpu.matmul %9, %3, %cst_10 {dimension_numbers = #tpu.dot_dimension_numbers<[1], [1], [0], [0], [0, 0, 1, 0], [], []>} : vector<4x128xf32>, vector<256x128xf32>, vector<4x256xf32> -> vector<4x256xf32>
    %c0_11 = arith.constant 0 : index
    %c0_12 = arith.constant 0 : index
    %c0_13 = arith.constant 0 : index
    %11 = vector.load %arg6[%c0_11, %c0_12, %c0_13] : memref<1x4x256xf32, #tpu.memory_space<vmem>>, vector<1x4x256xf32>
    %12 = vector.shape_cast %11 : vector<1x4x256xf32> to vector<4x256xf32>
    %13 = vector.shape_cast %10 : vector<4x256xf32> to vector<1x4x256xf32>
    tpu.vector_store %arg6[%c0_11, %c0_12, %c0_13], %13 {strides = array<i32>} : memref<1x4x256xf32, #tpu.memory_space<vmem>>, vector<1x4x256xf32>,
    %c0_14 = arith.constant 0 : index
    %c0_15 = arith.constant 0 : index
    %c0_16 = arith.constant 0 : index
    %14 = vector.load %arg4[%c0_14, %c0_15, %c0_16] : memref<1x128x4xf32, #tpu.memory_space<vmem>>, vector<1x128x4xf32>
    %15 = vector.shape_cast %14 : vector<1x128x4xf32> to vector<128x4xf32>
    %cst_17 = arith.constant dense<0.000000e+00> : vector<256x4xf32>
    %16 = tpu.matmul %3, %15, %cst_17 {dimension_numbers = #tpu.dot_dimension_numbers<[1], [0], [0], [1], [0, 0, 1, 1], [], []>} : vector<256x128xf32>, vector<128x4xf32>, vector<256x4xf32> -> vector<256x4xf32>
    %c0_18 = arith.constant 0 : index
    %c0_19 = arith.constant 0 : index
    %c0_20 = arith.constant 0 : index
    %17 = vector.load %arg7[%c0_18, %c0_19, %c0_20] : memref<1x256x4xf32, #tpu.memory_space<vmem>>, vector<1x256x4xf32>
    %18 = vector.shape_cast %17 : vector<1x256x4xf32> to vector<256x4xf32>
    %19 = vector.shape_cast %16 : vector<256x4xf32> to vector<1x256x4xf32>
    tpu.vector_store %arg7[%c0_18, %c0_19, %c0_20], %19 {strides = array<i32>} : memref<1x256x4xf32, #tpu.memory_space<vmem>>, vector<1x256x4xf32>,
    return
  }
  func.func @transform_0(%arg0: i32) -> (i32, i32) {
    %c0_i32 = arith.constant 0 : i32
    %c0_i32_0 = arith.constant 0 : i32
    %c0_i32_1 = arith.constant 0 : i32
    return %c0_i32, %c0_i32_0 : i32, i32
  }
  func.func @transform_1(%arg0: i32) -> (i32, i32, i32) {
    %c0_i32 = arith.constant 0 : i32
    %c0_i32_0 = arith.constant 0 : i32
    %c0_i32_1 = arith.constant 0 : i32
    return %arg0, %c0_i32, %c0_i32_0 : i32, i32, i32
  }
  func.func @transform_2(%arg0: i32) -> (i32, i32, i32) {
    %c0_i32 = arith.constant 0 : i32
    %c0_i32_0 = arith.constant 0 : i32
    %c0_i32_1 = arith.constant 0 : i32
    return %arg0, %c0_i32, %c0_i32_0 : i32, i32, i32
  }
  func.func @transform_3(%arg0: i32) -> (i32, i32, i32) {
    %c0_i32 = arith.constant 0 : i32
    %c0_i32_0 = arith.constant 0 : i32
    %c0_i32_1 = arith.constant 0 : i32
    return %arg0, %c0_i32, %c0_i32_0 : i32, i32, i32
  }
  func.func @transform_4(%arg0: i32) -> (i32, i32, i32) {
    %c0_i32 = arith.constant 0 : i32
    %c0_i32_0 = arith.constant 0 : i32
    %c0_i32_1 = arith.constant 0 : i32
    return %arg0, %c0_i32, %c0_i32_0 : i32, i32, i32
  }
  func.func @transform_5(%arg0: i32) -> (i32, i32, i32) {
    %c0_i32 = arith.constant 0 : i32
    %c0_i32_0 = arith.constant 0 : i32
    %c0_i32_1 = arith.constant 0 : i32
    return %arg0, %c0_i32, %c0_i32_0 : i32, i32, i32
  }
  func.func @transform_6(%arg0: i32) -> (i32, i32, i32) {
    %c0_i32 = arith.constant 0 : i32
    %c0_i32_0 = arith.constant 0 : i32
    %c0_i32_1 = arith.constant 0 : i32
    return %arg0, %c0_i32, %c0_i32_0 : i32, i32, i32
  }
}

</mosaic_0001>

<llo_original>
// kernel: tpu_custom_call.1
$region0: #{tpu_custom_call.1}
  #allocation0 [shape = 'u32[]', space=smem, size = 0x4, offset = 0x4, fixed_abs, tag = 'smem constant byte address 0x4 - core index']
  #allocation1 [shape = 'u32[144,128]{1,0:T(1,128)}', space=vmem, size = 0x12000, scoped, tag = 'internal scratch']
  %s0 = inlined_call_operand.vmem [shape: f32[256,16], index: 0, kind: input, shape index: {}]
  %s1 = inlined_call_operand.vmem [shape: f32[3,16,128], index: 1, kind: input, shape index: {}]
  %s2 = inlined_call_operand.vmem [shape: f32[3,4,128], index: 2, kind: input, shape index: {}]
  %s3 = inlined_call_operand.vmem [shape: f32[3,128,4], index: 3, kind: input, shape index: {}]
  %s4 = inlined_call_operand.hbm [shape: bf16[3,256,128], index: 4, kind: output, shape index: {0}]
  %s5 = inlined_call_operand.hbm [shape: f32[3,4,256], index: 5, kind: output, shape index: {1}]
  %s6 = inlined_call_operand.vmem [shape: f32[3,256,4], index: 6, kind: output, shape index: {2}]
  %7 = xla_tuple %s4, %s5, %s6
  %s8 = sld [smem:[#allocation0]]
  $region65: #{tpu_custom_call.1} parent=0
    _
  %s10 = ssub.s32 1, %s8
  %s11 = scalar_select 0, %s10, %s8
  $region1: #{tpu_custom_call.1} parent=0
    #allocation2 [shape = 'u8[131072]{0}', space=vmem, size = 0x20000, scoped, tag = 'output window, operand 0']
    #allocation3 [shape = 's32[2]{0}', space=sflag, size = 0x8, scoped, tag = 'scoped memory for tpu_custom_call.1']
    #allocation4 [shape = 'u8[8192]{0}', space=vmem, size = 0x2000, scoped, tag = 'output window, operand 1']
    #allocation5 [shape = 's32[2]{0}', space=sflag, size = 0x8, scoped, tag = 'scoped memory for tpu_custom_call.1']
    %12 = vsyncpa [#allocation3], 0
    %s13 = scalar_lea.sflag [#allocation3], 1
    %14 = vsyncpa %s13, 0
    %15 = vsyncpa [#allocation5], 0
    %s16 = scalar_lea.sflag [#allocation5], 1
    %17 = vsyncpa %s16, 0
    loop: start=0, step=1, limit=5
    $region2: #{tpu_custom_call.1} parent=1 // loop_pre_header
      _
    $region3: #{tpu_custom_call.1} parent=1 // loop_header
      %s19 = sphi 0, %s23
      %p20 = scmp.ge.s32.totalorder %s19, 5
      %s27 = sphi 0, %s27
      %s29 = sphi 0, %s27
      %s30 = sphi 0, %s29
      %s44 = sphi 0, %s30
      %s50 = sphi 0, %s52
      %s53 = sphi 0, %s50
      %s54 = sphi 0, %s53
      %s70 = sphi 0, %s54
      %s76 = sphi 0, %s78
      %s79 = sphi 0, %s76
      %s80 = sphi 0, %s79
      %s96 = sphi 0, %s80
      %s102 = sphi 0, %s104
      %s105 = sphi 0, %s102
      %s106 = sphi 0, %s105
      %s122 = sphi 0, %s106
      %s128 = sphi 0, %s130
      %s131 = sphi 0, %s128
      %s132 = sphi 0, %s131
      %s148 = sphi 0, %s132
      %s154 = sphi 0, %s156
      %s157 = sphi 0, %s154
      %s158 = sphi 0, %s157
      %s174 = sphi 0, %s158
      %s180 = sphi 0, %s182
      %s183 = sphi 0, %s180
      %s184 = sphi 0, %s183
      %s200 = sphi 0, %s184
    $region4: #{tpu_custom_call.1} parent=1 // loop_header_branch
      %22 = sbr.rel (%p20) target = $region8
    $region5: #{tpu_custom_call.1} parent=1 // loop_body
      %s24 = ssub.s32 %s19, 1
      %s25 = ssub.s32 %s19, 2
      %s26 = sadd.s32 %s19, 1
      %s28 = sadd.s32 %s27, 1
      %p31 = scmp.eq.s32.totalorder %s19, 2
      %p32 = scmp.ne.s32.totalorder %s27, %s29
      %p33 = scmp.eq.s32.totalorder %s19, 0
      %p34 = por %p32, %p33
      %p35 = scmp.ne.s32.totalorder %s27, %s29
      %p36 = scmp.eq.s32.totalorder %s24, 2
      %p37 = por %p35, %p36
      %p38 = scmp.ne.s32.totalorder %s29, %s30
      %p39 = scmp.eq.s32.totalorder %s24, 0
      %p40 = por %p38, %p39
      %p41 = scmp.ne.s32.totalorder %s29, %s30
      %p42 = scmp.eq.s32.totalorder %s25, 2
      %p43 = por %p41, %p42
      %p45 = scmp.ne.s32.totalorder %s30, %s44
      %p46 = scmp.eq.s32.totalorder %s25, 0
      %p47 = por %p45, %p46
      %s48 = ssub.s32 %s19, %s26
      %p49 = scmp.eq.s32.totalorder %s48, 0
      %s51 = sadd.s32 %s50, 1
      %s52 = scalar_select %p49, %s50, %s51
      %p55 = pneg %p49
      %p56 = scmp.eq.s32.totalorder %s19, 2
      %p57 = por %p55, %p56
      %p58 = scmp.ne.s32.totalorder %s50, %s53
      %p59 = scmp.eq.s32.totalorder %s19, 0
      %p60 = por %p58, %p59
      %p61 = scmp.ne.s32.totalorder %s50, %s53
      %p62 = scmp.eq.s32.totalorder %s24, 2
      %p63 = por %p61, %p62
      %p64 = scmp.ne.s32.totalorder %s53, %s54
      %p65 = scmp.eq.s32.totalorder %s24, 0
      %p66 = por %p64, %p65
      %p67 = scmp.ne.s32.totalorder %s53, %s54
      %p68 = scmp.eq.s32.totalorder %s25, 2
      %p69 = por %p67, %p68
      %p71 = scmp.ne.s32.totalorder %s54, %s70
      %p72 = scmp.eq.s32.totalorder %s25, 0
      %p73 = por %p71, %p72
      %s74 = ssub.s32 %s19, %s26
      %p75 = scmp.eq.s32.totalorder %s74, 0
      %s77 = sadd.s32 %s76, 1
      %s78 = scalar_select %p75, %s76, %s77
      %p81 = pneg %p75
      %p82 = scmp.eq.s32.totalorder %s19, 2
      %p83 = por %p81, %p82
      %p84 = scmp.ne.s32.totalorder %s76, %s79
      %p85 = scmp.eq.s32.totalorder %s19, 0
      %p86 = por %p84, %p85
      %p87 = scmp.ne.s32.totalorder %s76, %s79
      %p88 = scmp.eq.s32.totalorder %s24, 2
      %p89 = por %p87, %p88
      %p90 = scmp.ne.s32.totalorder %s79, %s80
      %p91 = scmp.eq.s32.totalorder %s24, 0
      %p92 = por %p90, %p91
      %p93 = scmp.ne.s32.totalorder %s79, %s80
      %p94 = scmp.eq.s32.totalorder %s25, 2
      %p95 = por %p93, %p94
      %p97 = scmp.ne.s32.totalorder %s80, %s96
      %p98 = scmp.eq.s32.totalorder %s25, 0
      %p99 = por %p97, %p98
      %s100 = ssub.s32 %s19, %s26
      %p101 = scmp.eq.s32.totalorder %s100, 0
      %s103 = sadd.s32 %s102, 1
      %s104 = scalar_select %p101, %s102, %s103
      %p107 = pneg %p101
      %p108 = scmp.eq.s32.totalorder %s19, 2
      %p109 = por %p107, %p108
      %p110 = scmp.ne.s32.totalorder %s102, %s105
      %p111 = scmp.eq.s32.totalorder %s19, 0
      %p112 = por %p110, %p111
      %p113 = scmp.ne.s32.totalorder %s102, %s105
      %p114 = scmp.eq.s32.totalorder %s24, 2
      %p115 = por %p113, %p114
      %p116 = scmp.ne.s32.totalorder %s105, %s106
      %p117 = scmp.eq.s32.totalorder %s24, 0
      %p118 = por %p116, %p117
      %p119 = scmp.ne.s32.totalorder %s105, %s106
      %p120 = scmp.eq.s32.totalorder %s25, 2
      %p121 = por %p119, %p120
      %p123 = scmp.ne.s32.totalorder %s106, %s122
      %p124 = scmp.eq.s32.totalorder %s25, 0
      %p125 = por %p123, %p124
      %s126 = ssub.s32 %s19, %s26
      %p127 = scmp.eq.s32.totalorder %s126, 0
      %s129 = sadd.s32 %s128, 1
      %s130 = scalar_select %p127, %s128, %s129
      %p133 = pneg %p127
      %p134 = scmp.eq.s32.totalorder %s19, 2
      %p135 = por %p133, %p134
      %p136 = scmp.ne.s32.totalorder %s128, %s131
      %p137 = scmp.eq.s32.totalorder %s19, 0
      %p138 = por %p136, %p137
      %p139 = scmp.ne.s32.totalorder %s128, %s131
      %p140 = scmp.eq.s32.totalorder %s24, 2
      %p141 = por %p139, %p140
      %p142 = scmp.ne.s32.totalorder %s131, %s132
      %p143 = scmp.eq.s32.totalorder %s24, 0
      %p144 = por %p142, %p143
      %p145 = scmp.ne.s32.totalorder %s131, %s132
      %p146 = scmp.eq.s32.totalorder %s25, 2
      %p147 = por %p145, %p146
      %p149 = scmp.ne.s32.totalorder %s132, %s148
      %p150 = scmp.eq.s32.totalorder %s25, 0
      %p151 = por %p149, %p150
      %s152 = ssub.s32 %s19, %s26
      %p153 = scmp.eq.s32.totalorder %s152, 0
      %s155 = sadd.s32 %s154, 1
      %s156 = scalar_select %p153, %s154, %s155
      %p159 = pneg %p153
      %p160 = scmp.eq.s32.totalorder %s19, 2
      %p161 = por %p159, %p160
      %p162 = scmp.ne.s32.totalorder %s154, %s157
      %p163 = scmp.eq.s32.totalorder %s19, 0
      %p164 = por %p162, %p163
      %p165 = scmp.ne.s32.totalorder %s154, %s157
      %p166 = scmp.eq.s32.totalorder %s24, 2
      %p167 = por %p165, %p166
      %p168 = scmp.ne.s32.totalorder %s157, %s158
      %p169 = scmp.eq.s32.totalorder %s24, 0
      %p170 = por %p168, %p169
      %p171 = scmp.ne.s32.totalorder %s157, %s158
      %p172 = scmp.eq.s32.totalorder %s25, 2
      %p173 = por %p171, %p172
      %p175 = scmp.ne.s32.totalorder %s158, %s174
      %p176 = scmp.eq.s32.totalorder %s25, 0
      %p177 = por %p175, %p176
      %s178 = ssub.s32 %s19, %s26
      %p179 = scmp.eq.s32.totalorder %s178, 0
      %s181 = sadd.s32 %s180, 1
      %s182 = scalar_select %p179, %s180, %s181
      %p185 = pneg %p179
      %p186 = scmp.eq.s32.totalorder %s19, 2
      %p187 = por %p185, %p186
      %p188 = scmp.ne.s32.totalorder %s180, %s183
      %p189 = scmp.eq.s32.totalorder %s19, 0
      %p190 = por %p188, %p189
      %p191 = scmp.ne.s32.totalorder %s180, %s183
      %p192 = scmp.eq.s32.totalorder %s24, 2
      %p193 = por %p191, %p192
      %p194 = scmp.ne.s32.totalorder %s183, %s184
      %p195 = scmp.eq.s32.totalorder %s24, 0
      %p196 = por %p194, %p195
      %p197 = scmp.ne.s32.totalorder %s183, %s184
      %p198 = scmp.eq.s32.totalorder %s25, 2
      %p199 = por %p197, %p198
      %p201 = scmp.ne.s32.totalorder %s184, %s200
      %p202 = scmp.eq.s32.totalorder %s25, 0
      %p203 = por %p201, %p202
      %p204 = scmp.le.s32.totalorder 1, %s19
      %p205 = scmp.lt.s32.totalorder %s19, 4
      %p206 = pnand %p204, %p205
      %p207 = pneg %p206
      // Predicated region
      $region9: #{tpu_custom_call.1} parent=5 // pred_check
        _
      $region10: #{tpu_custom_call.1} parent=5 // pred_check_branch
        %209 = sbr.rel (%p206) target = $region12
      $region11: #{tpu_custom_call.1} parent=5 // pred_region
        %s210 = ssub.s32 %s19, 1
        // Predicated region
        $region13: #{tpu_custom_call.1} parent=11 // pred_check
          %p211 = pneg %p40
        $region14: #{tpu_custom_call.1} parent=11 // pred_check_branch
          %213 = sbr.rel (%p211) target = $region16
        $region15: #{tpu_custom_call.1} parent=11 // pred_region
          _
        $region16: #{tpu_custom_call.1} parent=11 // pred_fallthru
          _
      $region12: #{tpu_custom_call.1} parent=5 // pred_fallthru
        _
      %p214 = scmp.lt.s32.totalorder %s19, 3
      // Predicated region
      $region17: #{tpu_custom_call.1} parent=5 // pred_check
        %p215 = pneg %p214
      $region18: #{tpu_custom_call.1} parent=5 // pred_check_branch
        %217 = sbr.rel (%p215) target = $region20
      $region19: #{tpu_custom_call.1} parent=5 // pred_region
        // Predicated region
        $region21: #{tpu_custom_call.1} parent=19 // pred_check
          %p218 = pneg %p60
        $region22: #{tpu_custom_call.1} parent=19 // pred_check_branch
          %220 = sbr.rel (%p218) target = $region24
        $region23: #{tpu_custom_call.1} parent=19 // pred_region
          %p221 = scmp.lt.s32.totalorder %s19, 2
          %s222 = scalar_select %p221, %s19, 2
          %s223 = smul.addr %s222, 2
          %s224 = smul.addr %s223, 8
          %s225 = scalar_lea.vmem %s1, %s224
        $region24: #{tpu_custom_call.1} parent=19 // pred_fallthru
          _
        // Predicated region
        $region25: #{tpu_custom_call.1} parent=19 // pred_check
          %p226 = pneg %p86
        $region26: #{tpu_custom_call.1} parent=19 // pred_check_branch
          %228 = sbr.rel (%p226) target = $region28
        $region27: #{tpu_custom_call.1} parent=19 // pred_region
          %p229 = scmp.lt.s32.totalorder %s19, 2
          %s230 = scalar_select %p229, %s19, 2
          %s231 = smul.addr %s230, 4
          %s232 = scalar_lea.vmem %s2, %s231
        $region28: #{tpu_custom_call.1} parent=19 // pred_fallthru
          _
        // Predicated region
        $region29: #{tpu_custom_call.1} parent=19 // pred_check
          %p233 = pneg %p112
        $region30: #{tpu_custom_call.1} parent=19 // pred_check_branch
          %235 = sbr.rel (%p233) target = $region32
        $region31: #{tpu_custom_call.1} parent=19 // pred_region
          %p236 = scmp.lt.s32.totalorder %s19, 2
          %s237 = scalar_select %p236, %s19, 2
          %s238 = smul.addr %s237, 16
          %s239 = smul.addr %s238, 8
          %s240 = scalar_lea.vmem %s3, %s239
        $region32: #{tpu_custom_call.1} parent=19 // pred_fallthru
          _
      $region20: #{tpu_custom_call.1} parent=5 // pred_fallthru
        _
      %p241 = scmp.le.s32.totalorder 1, %s19
      %p242 = scmp.lt.s32.totalorder %s19, 4
      %p243 = pnand %p241, %p242
      %p244 = pneg %p243
      // Predicated region
      $region33: #{tpu_custom_call.1} parent=5 // pred_check
        _
      $region34: #{tpu_custom_call.1} parent=5 // pred_check_branch
        %246 = sbr.rel (%p243) target = $region36
      $region35: #{tpu_custom_call.1} parent=5 // pred_region
        %s247 = ssub.s32 %s19, 1
        %p248 = pneg %p40
        %p249 = pneg %p37
        %p250 = scmp.lt.s32.totalorder %s24, 2
        %s251 = scalar_select %p250, %s24, 2
        %s252 = smul.addr %s251, 2
        %s253 = smul.addr %s252, 8
        %s254 = scalar_lea.vmem %s1, %s253
        %p255 = pneg %p66
        %p256 = pneg %p63
        %p257 = scmp.lt.s32.totalorder %s24, 2
        %s258 = scalar_select %p257, %s24, 2
        %s259 = smul.addr %s258, 4
        %s260 = scalar_lea.vmem %s2, %s259
        %p261 = pneg %p92
        %p262 = pneg %p89
        %p263 = scmp.lt.s32.totalorder %s24, 2
        %s264 = scalar_select %p263, %s24, 2
        %s265 = smul.addr %s264, 16
        %s266 = smul.addr %s265, 8
        %s267 = scalar_lea.vmem %s3, %s266
        %p268 = pneg %p118
        %p269 = pneg %p115
        %p270 = pneg %p144
        %p271 = pneg %p141
        %s272 = sand.u32 %s131, 1
        %s273 = scalar_lea.sflag [#allocation3], %s272
        %s274 = sand.u32 %s131, 1
        %s275 = smul.addr %s274, 128
        %s276 = scalar_lea.vmem [#allocation2], %s275
        %p277 = pneg %p170
        %p278 = pneg %p167
        %s279 = sand.u32 %s157, 1
        %s280 = scalar_lea.sflag [#allocation5], %s279
        %s281 = sand.u32 %s157, 1
        %s282 = smul.addr %s281, 8
        %s283 = scalar_lea.vmem [#allocation4], %s282
        %p284 = pneg %p196
        %p285 = pneg %p193
        %p286 = scmp.lt.s32.totalorder %s24, 2
        %s287 = scalar_select %p286, %s24, 2
        %s288 = smul.addr %s287, 32
        %s289 = smul.addr %s288, 8
        %s290 = scalar_lea.vmem %s6, %s289
        %p291 = scmp.lt.s32.totalorder %s24, 2
        %s292 = scalar_select %p291, %s24, 2
        %s293 = smul.addr %s292, 2
        %s294 = smul.addr %s293, 8
        %s295 = scalar_lea.vmem %s1, %s294
        %p296 = scmp.lt.s32.totalorder %s24, 2
        %s297 = scalar_select %p296, %s24, 2
        %s298 = smul.addr %s297, 4
        %s299 = scalar_lea.vmem %s2, %s298
        %p300 = scmp.lt.s32.totalorder %s24, 2
        %s301 = scalar_select %p300, %s24, 2
        %s302 = smul.addr %s301, 16
        %s303 = smul.addr %s302, 8
        %s304 = scalar_lea.vmem %s3, %s303
        %p305 = scmp.lt.s32.totalorder %s24, 2
        %s306 = scalar_select %p305, %s24, 2
        %s307 = smul.addr %s306, 32
        %s308 = smul.addr %s307, 8
        %s309 = scalar_lea.vmem %s6, %s308
        %v310 = vld [vmem:[%s0] sm:$0xff]
        %v311 = vld [vmem:[%s0 + $0x8] sm:$0xff]
        %v312 = vld [vmem:[%s0 + $0x10] sm:$0xff]
        %v313 = vld [vmem:[%s0 + $0x18] sm:$0xff]
        %v314 = vld [vmem:[%s0 + $0x20] sm:$0xff]
        %v315 = vld [vmem:[%s0 + $0x28] sm:$0xff]
        %v316 = vld [vmem:[%s0 + $0x30] sm:$0xff]
        %v317 = vld [vmem:[%s0 + $0x38] sm:$0xff]
        %v318 = vld [vmem:[%s0 + $0x40] sm:$0xff]
        %v319 = vld [vmem:[%s0 + $0x48] sm:$0xff]
        %v320 = vld [vmem:[%s0 + $0x50] sm:$0xff]
        %v321 = vld [vmem:[%s0 + $0x58] sm:$0xff]
        %v322 = vld [vmem:[%s0 + $0x60] sm:$0xff]
        %v323 = vld [vmem:[%s0 + $0x68] sm:$0xff]
        %v324 = vld [vmem:[%s0 + $0x70] sm:$0xff]
        %v325 = vld [vmem:[%s0 + $0x78] sm:$0xff]
        %v326 = vld [vmem:[%s0 + $0x80] sm:$0xff]
        %v327 = vld [vmem:[%s0 + $0x88] sm:$0xff]
        %v328 = vld [vmem:[%s0 + $0x90] sm:$0xff]
        %v329 = vld [vmem:[%s0 + $0x98] sm:$0xff]
        %v330 = vld [vmem:[%s0 + $0xa0] sm:$0xff]
        %v331 = vld [vmem:[%s0 + $0xa8] sm:$0xff]
        %v332 = vld [vmem:[%s0 + $0xb0] sm:$0xff]
        %v333 = vld [vmem:[%s0 + $0xb8] sm:$0xff]
        %v334 = vld [vmem:[%s0 + $0xc0] sm:$0xff]
        %v335 = vld [vmem:[%s0 + $0xc8] sm:$0xff]
        %v336 = vld [vmem:[%s0 + $0xd0] sm:$0xff]
        %v337 = vld [vmem:[%s0 + $0xd8] sm:$0xff]
        %v338 = vld [vmem:[%s0 + $0xe0] sm:$0xff]
        %v339 = vld [vmem:[%s0 + $0xe8] sm:$0xff]
        %v340 = vld [vmem:[%s0 + $0xf0] sm:$0xff]
        %v341 = vld [vmem:[%s0 + $0xf8] sm:$0xff]
        %v342 = vld [vmem:[%s295] sm:$0xff]
        %v343 = vld [vmem:[%s295 + $0x8] sm:$0xff]
        %vm344 = vcmask 130048
        %v346 = vsel %vm344, %v310, 0
        %v349 = vsel %vm344, %v311, 0
        %v352 = vsel %vm344, %v312, 0
        %v355 = vsel %vm344, %v313, 0
        %v358 = vsel %vm344, %v314, 0
        %v361 = vsel %vm344, %v315, 0
        %v364 = vsel %vm344, %v316, 0
        %v367 = vsel %vm344, %v317, 0
        %v370 = vsel %vm344, %v318, 0
        %v373 = vsel %vm344, %v319, 0
        %v376 = vsel %vm344, %v320, 0
        %v379 = vsel %vm344, %v321, 0
        %v382 = vsel %vm344, %v322, 0
        %v385 = vsel %vm344, %v323, 0
        %v388 = vsel %vm344, %v324, 0
        %v391 = vsel %vm344, %v325, 0
        %v394 = vsel %vm344, %v326, 0
        %v397 = vsel %vm344, %v327, 0
        %v400 = vsel %vm344, %v328, 0
        %v403 = vsel %vm344, %v329, 0
        %v406 = vsel %vm344, %v330, 0
        %v409 = vsel %vm344, %v331, 0
        %v412 = vsel %vm344, %v332, 0
        %v415 = vsel %vm344, %v333, 0
        %v418 = vsel %vm344, %v334, 0
        %v421 = vsel %vm344, %v335, 0
        %v424 = vsel %vm344, %v336, 0
        %v427 = vsel %vm344, %v337, 0
        %v430 = vsel %vm344, %v338, 0
        %v433 = vsel %vm344, %v339, 0
        %v436 = vsel %vm344, %v340, 0
        %v439 = vsel %vm344, %v341, 0
        %441 = vmatprep.subr.mxu0 0.0
        %442 = vmatpush1.msra.mxu0 %v342
        %443 = vmatprep.subr.mxu0 0.0
        %444 = vmatpush1.msra.mxu0 %v343
        %445 = vmatprep.subr.mxu0 0.0
        %446 = vmatpush1.msra.mxu0 0.0
        %447 = vmatprep.subr.mxu0 0.0
        %448 = vmatpush1.msra.mxu0 0.0
        %449 = vmatprep.subr.mxu0 0.0
        %450 = vmatpush1.msra.mxu0 0.0
        %451 = vmatprep.subr.mxu0 0.0
        %452 = vmatpush1.msra.mxu0 0.0
        %453 = vmatprep.subr.mxu0 0.0
        %454 = vmatpush1.msra.mxu0 0.0
        %455 = vmatprep.subr.mxu0 0.0
        %456 = vmatpush1.msra.mxu0 0.0
        %457 = vmatprep.subr.mxu0 0.0
        %458 = vmatpush1.msra.mxu0 0.0
        %459 = vmatprep.subr.mxu0 0.0
        %460 = vmatpush1.msra.mxu0 0.0
        %461 = vmatprep.subr.mxu0 0.0
        %462 = vmatpush1.msra.mxu0 0.0
        %463 = vmatprep.subr.mxu0 0.0
        %464 = vmatpush1.msra.mxu0 0.0
        %465 = vmatprep.subr.mxu0 0.0
        %466 = vmatpush1.msra.mxu0 0.0
        %467 = vmatprep.subr.mxu0 0.0
        %468 = vmatpush1.msra.mxu0 0.0
        %469 = vmatprep.subr.mxu0 0.0
        %470 = vmatpush1.msra.mxu0 0.0
        %471 = vmatprep.subr.mxu0 0.0
        %472 = vmatpush1.msra.mxu0 0.0
        %473 = vmatprep.subr.mxu0 0.0
        %474 = vmatpush1.msra.mxu0 0.0
        %475 = vmatprep.subr.mxu0 0.0
        %476 = vmatpush1.msra.mxu0 0.0
        %477 = vmatprep.subr.mxu0 0.0
        %478 = vmatpush1.msra.mxu0 0.0
        %479 = vmatprep.subr.mxu0 0.0
        %480 = vmatpush1.msra.mxu0 0.0
        %481 = vmatprep.subr.mxu0 0.0
        %482 = vmatpush1.msra.mxu0 0.0
        %483 = vmatprep.subr.mxu0 0.0
        %484 = vmatpush1.msra.mxu0 0.0
        %485 = vmatprep.subr.mxu0 0.0
        %486 = vmatpush1.msra.mxu0 0.0
        %487 = vmatprep.subr.mxu0 0.0
        %488 = vmatpush1.msra.mxu0 0.0
        %489 = vmatprep.subr.mxu0 0.0
        %490 = vmatpush1.msra.mxu0 0.0
        %491 = vmatprep.subr.mxu0 0.0
        %492 = vmatpush1.msra.mxu0 0.0
        %493 = vmatprep.subr.mxu0 0.0
        %494 = vmatpush1.msra.mxu0 0.0
        %495 = vmatprep.subr.mxu0 0.0
        %496 = vmatpush1.msra.mxu0 0.0
        %497 = vmatprep.subr.mxu0 0.0
        %498 = vmatpush1.msra.mxu0 0.0
        %499 = vmatprep.subr.mxu0 0.0
        %500 = vmatpush1.msra.mxu0 0.0
        %501 = vmatprep.subr.mxu0 0.0
        %502 = vmatpush1.msra.mxu0 0.0
        %503 = vmatprep.subr.mxu0 0.0
        %504 = vmatpush1.msra.mxu0 0.0
        %505 = vmatprep.mubr.f32.mxu0 0.0
        %506 = vmatmul.mubr.f32.gmra.mrb[0].mxu0 %v346
        %v507 = vpop.f32.mrb[0].mxu0
        %v508 = vadd.f32 0.0, %v507
        %v509 = vpop.f32.mrb[0].mxu0
        %510 = vmatprep.mubr.f32.mxu0 0.0
        %511 = vmatmul.mubr.f32.gmra.mrb[0].mxu0 %v349
        %v512 = vpop.f32.mrb[0].mxu0
        %v513 = vadd.f32 0.0, %v512
        %v514 = vpop.f32.mrb[0].mxu0
        %515 = vmatprep.mubr.f32.mxu0 0.0
        %516 = vmatmul.mubr.f32.gmra.mrb[0].mxu0 %v352
        %v517 = vpop.f32.mrb[0].mxu0
        %v518 = vadd.f32 0.0, %v517
        %v519 = vpop.f32.mrb[0].mxu0
        %520 = vmatprep.mubr.f32.mxu0 0.0
        %521 = vmatmul.mubr.f32.gmra.mrb[0].mxu0 %v355
        %v522 = vpop.f32.mrb[0].mxu0
        %v523 = vadd.f32 0.0, %v522
        %v524 = vpop.f32.mrb[0].mxu0
        %525 = vmatprep.mubr.f32.mxu0 0.0
        %526 = vmatmul.mubr.f32.gmra.mrb[0].mxu0 %v358
        %v527 = vpop.f32.mrb[0].mxu0
        %v528 = vadd.f32 0.0, %v527
        %v529 = vpop.f32.mrb[0].mxu0
        %530 = vmatprep.mubr.f32.mxu0 0.0
        %531 = vmatmul.mubr.f32.gmra.mrb[0].mxu0 %v361
        %v532 = vpop.f32.mrb[0].mxu0
        %v533 = vadd.f32 0.0, %v532
        %v534 = vpop.f32.mrb[0].mxu0
        %535 = vmatprep.mubr.f32.mxu0 0.0
        %536 = vmatmul.mubr.f32.gmra.mrb[0].mxu0 %v364
        %v537 = vpop.f32.mrb[0].mxu0
        %v538 = vadd.f32 0.0, %v537
        %v539 = vpop.f32.mrb[0].mxu0
        %540 = vmatprep.mubr.f32.mxu0 0.0
        %541 = vmatmul.mubr.f32.gmra.mrb[0].mxu0 %v367
        %v542 = vpop.f32.mrb[0].mxu0
        %v543 = vadd.f32 0.0, %v542
        %v544 = vpop.f32.mrb[0].mxu0
        %545 = vmatprep.mubr.f32.mxu0 0.0
        %546 = vmatmul.mubr.f32.gmra.mrb[0].mxu0 %v370
        %v547 = vpop.f32.mrb[0].mxu0
        %v548 = vadd.f32 0.0, %v547
        %v549 = vpop.f32.mrb[0].mxu0
        %550 = vmatprep.mubr.f32.mxu0 0.0
        %551 = vmatmul.mubr.f32.gmra.mrb[0].mxu0 %v373
        %v552 = vpop.f32.mrb[0].mxu0
        %v553 = vadd.f32 0.0, %v552
        %v554 = vpop.f32.mrb[0].mxu0
        %555 = vmatprep.mubr.f32.mxu0 0.0
        %556 = vmatmul.mubr.f32.gmra.mrb[0].mxu0 %v376
        %v557 = vpop.f32.mrb[0].mxu0
        %v558 = vadd.f32 0.0, %v557
        %v559 = vpop.f32.mrb[0].mxu0
        %560 = vmatprep.mubr.f32.mxu0 0.0
        %561 = vmatmul.mubr.f32.gmra.mrb[0].mxu0 %v379
        %v562 = vpop.f32.mrb[0].mxu0
        %v563 = vadd.f32 0.0, %v562
        %v564 = vpop.f32.mrb[0].mxu0
        %565 = vmatprep.mubr.f32.mxu0 0.0
        %566 = vmatmul.mubr.f32.gmra.mrb[0].mxu0 %v382
        %v567 = vpop.f32.mrb[0].mxu0
        %v568 = vadd.f32 0.0, %v567
        %v569 = vpop.f32.mrb[0].mxu0
        %570 = vmatprep.mubr.f32.mxu0 0.0
        %571 = vmatmul.mubr.f32.gmra.mrb[0].mxu0 %v385
        %v572 = vpop.f32.mrb[0].mxu0
        %v573 = vadd.f32 0.0, %v572
        %v574 = vpop.f32.mrb[0].mxu0
        %575 = vmatprep.mubr.f32.mxu0 0.0
        %576 = vmatmul.mubr.f32.gmra.mrb[0].mxu0 %v388
        %v577 = vpop.f32.mrb[0].mxu0
        %v578 = vadd.f32 0.0, %v577
        %v579 = vpop.f32.mrb[0].mxu0
        %580 = vmatprep.mubr.f32.mxu0 0.0
        %581 = vmatmul.mubr.f32.gmra.mrb[0].mxu0 %v391
        %v582 = vpop.f32.mrb[0].mxu0
        %v583 = vadd.f32 0.0, %v582
        %v584 = vpop.f32.mrb[0].mxu0
        %585 = vmatprep.mubr.f32.mxu0 0.0
        %586 = vmatmul.mubr.f32.gmra.mrb[0].mxu0 %v394
        %v587 = vpop.f32.mrb[0].mxu0
        %v588 = vadd.f32 0.0, %v587
        %v589 = vpop.f32.mrb[0].mxu0
        %590 = vmatprep.mubr.f32.mxu0 0.0
        %591 = vmatmul.mubr.f32.gmra.mrb[0].mxu0 %v397
        %v592 = vpop.f32.mrb[0].mxu0
        %v593 = vadd.f32 0.0, %v592
        %v594 = vpop.f32.mrb[0].mxu0
        %595 = vmatprep.mubr.f32.mxu0 0.0
        %596 = vmatmul.mubr.f32.gmra.mrb[0].mxu0 %v400
        %v597 = vpop.f32.mrb[0].mxu0
        %v598 = vadd.f32 0.0, %v597
        %v599 = vpop.f32.mrb[0].mxu0
        %600 = vmatprep.mubr.f32.mxu0 0.0
        %601 = vmatmul.mubr.f32.gmra.mrb[0].mxu0 %v403
        %v602 = vpop.f32.mrb[0].mxu0
        %v603 = vadd.f32 0.0, %v602
        %v604 = vpop.f32.mrb[0].mxu0
        %605 = vmatprep.mubr.f32.mxu0 0.0
        %606 = vmatmul.mubr.f32.gmra.mrb[0].mxu0 %v406
        %v607 = vpop.f32.mrb[0].mxu0
        %v608 = vadd.f32 0.0, %v607
        %v609 = vpop.f32.mrb[0].mxu0
        %610 = vmatprep.mubr.f32.mxu0 0.0
        %611 = vmatmul.mubr.f32.gmra.mrb[0].mxu0 %v409
        %v612 = vpop.f32.mrb[0].mxu0
        %v613 = vadd.f32 0.0, %v612
        %v614 = vpop.f32.mrb[0].mxu0
        %615 = vmatprep.mubr.f32.mxu0 0.0
        %616 = vmatmul.mubr.f32.gmra.mrb[0].mxu0 %v412
        %v617 = vpop.f32.mrb[0].mxu0
        %v618 = vadd.f32 0.0, %v617
        %v619 = vpop.f32.mrb[0].mxu0
        %620 = vmatprep.mubr.f32.mxu0 0.0
        %621 = vmatmul.mubr.f32.gmra.mrb[0].mxu0 %v415
        %v622 = vpop.f32.mrb[0].mxu0
        %v623 = vadd.f32 0.0, %v622
        %v624 = vpop.f32.mrb[0].mxu0
        %625 = vmatprep.mubr.f32.mxu0 0.0
        %626 = vmatmul.mubr.f32.gmra.mrb[0].mxu0 %v418
        %v627 = vpop.f32.mrb[0].mxu0
        %v628 = vadd.f32 0.0, %v627
        %v629 = vpop.f32.mrb[0].mxu0
        %630 = vmatprep.mubr.f32.mxu0 0.0
        %631 = vmatmul.mubr.f32.gmra.mrb[0].mxu0 %v421
        %v632 = vpop.f32.mrb[0].mxu0
        %v633 = vadd.f32 0.0, %v632
        %v634 = vpop.f32.mrb[0].mxu0
        %635 = vmatprep.mubr.f32.mxu0 0.0
        %636 = vmatmul.mubr.f32.gmra.mrb[0].mxu0 %v424
        %v637 = vpop.f32.mrb[0].mxu0
        %v638 = vadd.f32 0.0, %v637
        %v639 = vpop.f32.mrb[0].mxu0
        %640 = vmatprep.mubr.f32.mxu0 0.0
        %641 = vmatmul.mubr.f32.gmra.mrb[0].mxu0 %v427
        %v642 = vpop.f32.mrb[0].mxu0
        %v643 = vadd.f32 0.0, %v642
        %v644 = vpop.f32.mrb[0].mxu0
        %645 = vmatprep.mubr.f32.mxu0 0.0
        %646 = vmatmul.mubr.f32.gmra.mrb[0].mxu0 %v430
        %v647 = vpop.f32.mrb[0].mxu0
        %v648 = vadd.f32 0.0, %v647
        %v649 = vpop.f32.mrb[0].mxu0
        %650 = vmatprep.mubr.f32.mxu0 0.0
        %651 = vmatmul.mubr.f32.gmra.mrb[0].mxu0 %v433
        %v652 = vpop.f32.mrb[0].mxu0
        %v653 = vadd.f32 0.0, %v652
        %v654 = vpop.f32.mrb[0].mxu0
        %655 = vmatprep.mubr.f32.mxu0 0.0
        %656 = vmatmul.mubr.f32.gmra.mrb[0].mxu0 %v436
        %v657 = vpop.f32.mrb[0].mxu0
        %v658 = vadd.f32 0.0, %v657
        %v659 = vpop.f32.mrb[0].mxu0
        %660 = vmatprep.mubr.f32.mxu0 0.0
        %661 = vmatmul.mubr.f32.gmra.mrb[0].mxu0 %v439
        %v662 = vpop.f32.mrb[0].mxu0
        %v663 = vadd.f32 0.0, %v662
        %v664 = vpop.f32.mrb[0].mxu0
        %665 = vdwg.mxu0
        %v666 = vpack.c.bf16 %v513, %v508
        %v667 = vpack.c.bf16 %v523, %v518
        %v668 = vpack.c.bf16 %v533, %v528
        %v669 = vpack.c.bf16 %v543, %v538
        %v670 = vpack.c.bf16 %v553, %v548
        %v671 = vpack.c.bf16 %v563, %v558
        %v672 = vpack.c.bf16 %v573, %v568
        %v673 = vpack.c.bf16 %v583, %v578
        %v674 = vpack.c.bf16 %v593, %v588
        %v675 = vpack.c.bf16 %v603, %v598
        %v676 = vpack.c.bf16 %v613, %v608
        %v677 = vpack.c.bf16 %v623, %v618
        %v678 = vpack.c.bf16 %v633, %v628
        %v679 = vpack.c.bf16 %v643, %v638
        %v680 = vpack.c.bf16 %v653, %v648
        %v681 = vpack.c.bf16 %v663, %v658
        %v698 = vunpack.c.l.b16 %v666
        %v699 = vunpack.c.h.b16 %v666
        %v700 = vunpack.c.l.b16 %v667
        %v701 = vunpack.c.h.b16 %v667
        %v702 = vunpack.c.l.b16 %v668
        %v703 = vunpack.c.h.b16 %v668
        %v704 = vunpack.c.l.b16 %v669
        %v705 = vunpack.c.h.b16 %v669
        %v706 = vunpack.c.l.b16 %v670
        %v707 = vunpack.c.h.b16 %v670
        %v708 = vunpack.c.l.b16 %v671
        %v709 = vunpack.c.h.b16 %v671
        %v710 = vunpack.c.l.b16 %v672
        %v711 = vunpack.c.h.b16 %v672
        %v712 = vunpack.c.l.b16 %v673
        %v713 = vunpack.c.h.b16 %v673
        %v714 = vunpack.c.l.b16 %v674
        %v715 = vunpack.c.h.b16 %v674
        %v716 = vunpack.c.l.b16 %v675
        %v717 = vunpack.c.h.b16 %v675
        %v718 = vunpack.c.l.b16 %v676
        %v719 = vunpack.c.h.b16 %v676
        %v720 = vunpack.c.l.b16 %v677
        %v721 = vunpack.c.h.b16 %v677
        %v722 = vunpack.c.l.b16 %v678
        %v723 = vunpack.c.h.b16 %v678
        %v724 = vunpack.c.l.b16 %v679
        %v725 = vunpack.c.h.b16 %v679
        %v726 = vunpack.c.l.b16 %v680
        %v727 = vunpack.c.h.b16 %v680
        %v728 = vunpack.c.l.b16 %v681
        %v729 = vunpack.c.h.b16 %v681
        %v730 = vpack.c.b16 %v698, %v698
        %v731 = vpack.c.b16 %v699, %v699
        %v732 = vpack.c.b16 %v700, %v700
        %v733 = vpack.c.b16 %v701, %v701
        %v734 = vpack.c.b16 %v702, %v702
        %v735 = vpack.c.b16 %v703, %v703
        %v736 = vpack.c.b16 %v704, %v704
        %v737 = vpack.c.b16 %v705, %v705
        %v738 = vpack.c.b16 %v706, %v706
        %v739 = vpack.c.b16 %v707, %v707
        %v740 = vpack.c.b16 %v708, %v708
        %v741 = vpack.c.b16 %v709, %v709
        %v742 = vpack.c.b16 %v710, %v710
        %v743 = vpack.c.b16 %v711, %v711
        %v744 = vpack.c.b16 %v712, %v712
        %v745 = vpack.c.b16 %v713, %v713
        %v746 = vpack.c.b16 %v714, %v714
        %v747 = vpack.c.b16 %v715, %v715
        %v748 = vpack.c.b16 %v716, %v716
        %v749 = vpack.c.b16 %v717, %v717
        %v750 = vpack.c.b16 %v718, %v718
        %v751 = vpack.c.b16 %v719, %v719
        %v752 = vpack.c.b16 %v720, %v720
        %v753 = vpack.c.b16 %v721, %v721
        %v754 = vpack.c.b16 %v722, %v722
        %v755 = vpack.c.b16 %v723, %v723
        %v756 = vpack.c.b16 %v724, %v724
        %v757 = vpack.c.b16 %v725, %v725
        %v758 = vpack.c.b16 %v726, %v726
        %v759 = vpack.c.b16 %v727, %v727
        %v760 = vpack.c.b16 %v728, %v728
        %v761 = vpack.c.b16 %v729, %v729
        %794 = vst [vmem:[%s276] sm:$0xf] %v730
        %795 = vst [vmem:[%s276 + $0x4] sm:$0xf] %v731
        %796 = vst [vmem:[%s276 + $0x8] sm:$0xf] %v732
        %797 = vst [vmem:[%s276 + $0xc] sm:$0xf] %v733
        %798 = vst [vmem:[%s276 + $0x10] sm:$0xf] %v734
        %799 = vst [vmem:[%s276 + $0x14] sm:$0xf] %v735
        %800 = vst [vmem:[%s276 + $0x18] sm:$0xf] %v736
        %801 = vst [vmem:[%s276 + $0x1c] sm:$0xf] %v737
        %802 = vst [vmem:[%s276 + $0x20] sm:$0xf] %v738
        %803 = vst [vmem:[%s276 + $0x24] sm:$0xf] %v739
        %804 = vst [vmem:[%s276 + $0x28] sm:$0xf] %v740
        %805 = vst [vmem:[%s276 + $0x2c] sm:$0xf] %v741
        %806 = vst [vmem:[%s276 + $0x30] sm:$0xf] %v742
        %807 = vst [vmem:[%s276 + $0x34] sm:$0xf] %v743
        %808 = vst [vmem:[%s276 + $0x38] sm:$0xf] %v744
        %809 = vst [vmem:[%s276 + $0x3c] sm:$0xf] %v745
        %810 = vst [vmem:[%s276 + $0x40] sm:$0xf] %v746
        %811 = vst [vmem:[%s276 + $0x44] sm:$0xf] %v747
        %812 = vst [vmem:[%s276 + $0x48] sm:$0xf] %v748
        %813 = vst [vmem:[%s276 + $0x4c] sm:$0xf] %v749
        %814 = vst [vmem:[%s276 + $0x50] sm:$0xf] %v750
        %815 = vst [vmem:[%s276 + $0x54] sm:$0xf] %v751
        %816 = vst [vmem:[%s276 + $0x58] sm:$0xf] %v752
        %817 = vst [vmem:[%s276 + $0x5c] sm:$0xf] %v753
        %818 = vst [vmem:[%s276 + $0x60] sm:$0xf] %v754
        %819 = vst [vmem:[%s276 + $0x64] sm:$0xf] %v755
        %820 = vst [vmem:[%s276 + $0x68] sm:$0xf] %v756
        %821 = vst [vmem:[%s276 + $0x6c] sm:$0xf] %v757
        %822 = vst [vmem:[%s276 + $0x70] sm:$0xf] %v758
        %823 = vst [vmem:[%s276 + $0x74] sm:$0xf] %v759
        %824 = vst [vmem:[%s276 + $0x78] sm:$0xf] %v760
        %825 = vst [vmem:[%s276 + $0x7c] sm:$0xf] %v761
        %v826 = vld [vmem:[%s299] sm:$0xf]
        %827 = vmatprep.subr.mxu0 0.0
        %828 = vmatpush1.xpose.msra.mxu0 %v508
        %829 = vmatprep.subr.mxu0 0.0
        %830 = vmatpush1.xpose.msra.mxu0 %v513
        %831 = vmatprep.subr.mxu0 0.0
        %832 = vmatpush1.xpose.msra.mxu0 %v518
        %833 = vmatprep.subr.mxu0 0.0
        %834 = vmatpush1.xpose.msra.mxu0 %v523
        %835 = vmatprep.subr.mxu0 0.0
        %836 = vmatpush1.xpose.msra.mxu0 %v528
        %837 = vmatprep.subr.mxu0 0.0
        %838 = vmatpush1.xpose.msra.mxu0 %v533
        %839 = vmatprep.subr.mxu0 0.0
        %840 = vmatpush1.xpose.msra.mxu0 %v538
        %841 = vmatprep.subr.mxu0 0.0
        %842 = vmatpush1.xpose.msra.mxu0 %v543
        %843 = vmatprep.subr.mxu0 0.0
        %844 = vmatpush1.xpose.msra.mxu0 %v548
        %845 = vmatprep.subr.mxu0 0.0
        %846 = vmatpush1.xpose.msra.mxu0 %v553
        %847 = vmatprep.subr.mxu0 0.0
        %848 = vmatpush1.xpose.msra.mxu0 %v558
        %849 = vmatprep.subr.mxu0 0.0
        %850 = vmatpush1.xpose.msra.mxu0 %v563
        %851 = vmatprep.subr.mxu0 0.0
        %852 = vmatpush1.xpose.msra.mxu0 %v568
        %853 = vmatprep.subr.mxu0 0.0
        %854 = vmatpush1.xpose.msra.mxu0 %v573
        %855 = vmatprep.subr.mxu0 0.0
        %856 = vmatpush1.xpose.msra.mxu0 %v578
        %857 = vmatprep.subr.mxu0 0.0
        %858 = vmatpush1.xpose.msra.mxu0 %v583
        %859 = vmatprep.subr.mxu0 0.0
        %860 = vmatpush1.xpose.msra.mxu0 %v588
        %861 = vmatprep.subr.mxu0 0.0
        %862 = vmatpush1.xpose.msra.mxu0 %v593
        %863 = vmatprep.subr.mxu0 0.0
        %864 = vmatpush1.xpose.msra.mxu0 %v598
        %865 = vmatprep.subr.mxu0 0.0
        %866 = vmatpush1.xpose.msra.mxu0 %v603
        %867 = vmatprep.subr.mxu0 0.0
        %868 = vmatpush1.xpose.msra.mxu0 %v608
        %869 = vmatprep.subr.mxu0 0.0
        %870 = vmatpush1.xpose.msra.mxu0 %v613
        %871 = vmatprep.subr.mxu0 0.0
        %872 = vmatpush1.xpose.msra.mxu0 %v618
        %873 = vmatprep.subr.mxu0 0.0
        %874 = vmatpush1.xpose.msra.mxu0 %v623
        %875 = vmatprep.subr.mxu0 0.0
        %876 = vmatpush1.xpose.msra.mxu0 %v628
        %877 = vmatprep.subr.mxu0 0.0
        %878 = vmatpush1.xpose.msra.mxu0 %v633
        %879 = vmatprep.subr.mxu0 0.0
        %880 = vmatpush1.xpose.msra.mxu0 %v638
        %881 = vmatprep.subr.mxu0 0.0
        %882 = vmatpush1.xpose.msra.mxu0 %v643
        %883 = vmatprep.subr.mxu0 0.0
        %884 = vmatpush1.xpose.msra.mxu0 %v648
        %885 = vmatprep.subr.mxu0 0.0
        %886 = vmatpush1.xpose.msra.mxu0 %v653
        %887 = vmatprep.subr.mxu0 0.0
        %888 = vmatpush1.xpose.msra.mxu0 %v658
        %889 = vmatprep.subr.mxu0 0.0
        %890 = vmatpush1.xpose.msra.mxu0 %v663
        %891 = vmatprep.mubr.f32.mxu0 0.0
        %892 = vmatmul.mubr.f32.gmra.mrb[0].mxu0 %v826
        %v893 = vpop.f32.mrb[0].mxu0
        %v894 = vadd.f32 0.0, %v893
        %v895 = vpop.f32.mrb[0].mxu0
        %v896 = vadd.f32 0.0, %v895
        %897 = vdwg.mxu0
        %v900 = vcombine.low %v894, %v896
        %902 = vst [vmem:[%s283] sm:$0xff] %v900
        %v903 = vld [vmem:[%s304] sm:$0xff]
        %v904 = vld [vmem:[%s304 + $0x8] sm:$0xff]
        %v905 = vld [vmem:[%s304 + $0x10] sm:$0xff]
        %v906 = vld [vmem:[%s304 + $0x18] sm:$0xff]
        %v907 = vld [vmem:[%s304 + $0x20] sm:$0xff]
        %v908 = vld [vmem:[%s304 + $0x28] sm:$0xff]
        %v909 = vld [vmem:[%s304 + $0x30] sm:$0xff]
        %v910 = vld [vmem:[%s304 + $0x38] sm:$0xff]
        %v911 = vld [vmem:[%s304 + $0x40] sm:$0xff]
        %v912 = vld [vmem:[%s304 + $0x48] sm:$0xff]
        %v913 = vld [vmem:[%s304 + $0x50] sm:$0xff]
        %v914 = vld [vmem:[%s304 + $0x58] sm:$0xff]
        %v915 = vld [vmem:[%s304 + $0x60] sm:$0xff]
        %v916 = vld [vmem:[%s304 + $0x68] sm:$0xff]
        %v917 = vld [vmem:[%s304 + $0x70] sm:$0xff]
        %v918 = vld [vmem:[%s304 + $0x78] sm:$0xff]
        %919 = vmatprep.subr.mxu0 0.0
        %920 = vmatpush1.msra.mxu0 %v903
        %921 = vmatprep.subr.mxu0 0.0
        %922 = vmatpush1.msra.mxu0 %v904
        %923 = vmatprep.subr.mxu0 0.0
        %924 = vmatpush1.msra.mxu0 %v905
        %925 = vmatprep.subr.mxu0 0.0
        %926 = vmatpush1.msra.mxu0 %v906
        %927 = vmatprep.subr.mxu0 0.0
        %928 = vmatpush1.msra.mxu0 %v907
        %929 = vmatprep.subr.mxu0 0.0
        %930 = vmatpush1.msra.mxu0 %v908
        %931 = vmatprep.subr.mxu0 0.0
        %932 = vmatpush1.msra.mxu0 %v909
        %933 = vmatprep.subr.mxu0 0.0
        %934 = vmatpush1.msra.mxu0 %v910
        %935 = vmatprep.subr.mxu0 0.0
        %936 = vmatpush1.msra.mxu0 %v911
        %937 = vmatprep.subr.mxu0 0.0
        %938 = vmatpush1.msra.mxu0 %v912
        %939 = vmatprep.subr.mxu0 0.0
        %940 = vmatpush1.msra.mxu0 %v913
        %941 = vmatprep.subr.mxu0 0.0
        %942 = vmatpush1.msra.mxu0 %v914
        %943 = vmatprep.subr.mxu0 0.0
        %944 = vmatpush1.msra.mxu0 %v915
        %945 = vmatprep.subr.mxu0 0.0
        %946 = vmatpush1.msra.mxu0 %v916
        %947 = vmatprep.subr.mxu0 0.0
        %948 = vmatpush1.msra.mxu0 %v917
        %949 = vmatprep.subr.mxu0 0.0
        %950 = vmatpush1.msra.mxu0 %v918
        %951 = vmatprep.subr.mxu0 0.0
        %952 = vmatpush1.msra.mxu0 0.0
        %953 = vmatprep.subr.mxu0 0.0
        %954 = vmatpush1.msra.mxu0 0.0
        %955 = vmatprep.subr.mxu0 0.0
        %956 = vmatpush1.msra.mxu0 0.0
        %957 = vmatprep.subr.mxu0 0.0
        %958 = vmatpush1.msra.mxu0 0.0
        %959 = vmatprep.subr.mxu0 0.0
        %960 = vmatpush1.msra.mxu0 0.0
        %961 = vmatprep.subr.mxu0 0.0
        %962 = vmatpush1.msra.mxu0 0.0
        %963 = vmatprep.subr.mxu0 0.0
        %964 = vmatpush1.msra.mxu0 0.0
        %965 = vmatprep.subr.mxu0 0.0
        %966 = vmatpush1.msra.mxu0 0.0
        %967 = vmatprep.subr.mxu0 0.0
        %968 = vmatpush1.msra.mxu0 0.0
        %969 = vmatprep.subr.mxu0 0.0
        %970 = vmatpush1.msra.mxu0 0.0
        %971 = vmatprep.subr.mxu0 0.0
        %972 = vmatpush1.msra.mxu0 0.0
        %973 = vmatprep.subr.mxu0 0.0
        %974 = vmatpush1.msra.mxu0 0.0
        %975 = vmatprep.subr.mxu0 0.0
        %976 = vmatpush1.msra.mxu0 0.0
        %977 = vmatprep.subr.mxu0 0.0
        %978 = vmatpush1.msra.mxu0 0.0
        %979 = vmatprep.subr.mxu0 0.0
        %980 = vmatpush1.msra.mxu0 0.0
        %981 = vmatprep.subr.mxu0 0.0
        %982 = vmatpush1.msra.mxu0 0.0
        %983 = vmatprep.mubr.f32.mxu0 0.0
        %984 = vmatmul.mubr.f32.gmra.mrb[0].mxu0 %v508
        %v985 = vpop.f32.mrb[0].mxu0
        %v986 = vadd.f32 0.0, %v985
        %v987 = vpop.f32.mrb[0].mxu0
        %988 = vmatprep.mubr.f32.mxu0 0.0
        %989 = vmatmul.mubr.f32.gmra.mrb[0].mxu0 %v513
        %v990 = vpop.f32.mrb[0].mxu0
        %v991 = vadd.f32 0.0, %v990
        %v992 = vpop.f32.mrb[0].mxu0
        %993 = vmatprep.mubr.f32.mxu0 0.0
        %994 = vmatmul.mubr.f32.gmra.mrb[0].mxu0 %v518
        %v995 = vpop.f32.mrb[0].mxu0
        %v996 = vadd.f32 0.0, %v995
        %v997 = vpop.f32.mrb[0].mxu0
        %998 = vmatprep.mubr.f32.mxu0 0.0
        %999 = vmatmul.mubr.f32.gmra.mrb[0].mxu0 %v523
        %v1000 = vpop.f32.mrb[0].mxu0
        %v1001 = vadd.f32 0.0, %v1000
        %v1002 = vpop.f32.mrb[0].mxu0
        %1003 = vmatprep.mubr.f32.mxu0 0.0
        %1004 = vmatmul.mubr.f32.gmra.mrb[0].mxu0 %v528
        %v1005 = vpop.f32.mrb[0].mxu0
        %v1006 = vadd.f32 0.0, %v1005
        %v1007 = vpop.f32.mrb[0].mxu0
        %1008 = vmatprep.mubr.f32.mxu0 0.0
        %1009 = vmatmul.mubr.f32.gmra.mrb[0].mxu0 %v533
        %v1010 = vpop.f32.mrb[0].mxu0
        %v1011 = vadd.f32 0.0, %v1010
        %v1012 = vpop.f32.mrb[0].mxu0
        %1013 = vmatprep.mubr.f32.mxu0 0.0
        %1014 = vmatmul.mubr.f32.gmra.mrb[0].mxu0 %v538
        %v1015 = vpop.f32.mrb[0].mxu0
        %v1016 = vadd.f32 0.0, %v1015
        %v1017 = vpop.f32.mrb[0].mxu0
        %1018 = vmatprep.mubr.f32.mxu0 0.0
        %1019 = vmatmul.mubr.f32.gmra.mrb[0].mxu0 %v543
        %v1020 = vpop.f32.mrb[0].mxu0
        %v1021 = vadd.f32 0.0, %v1020
        %v1022 = vpop.f32.mrb[0].mxu0
        %1023 = vmatprep.mubr.f32.mxu0 0.0
        %1024 = vmatmul.mubr.f32.gmra.mrb[0].mxu0 %v548
        %v1025 = vpop.f32.mrb[0].mxu0
        %v1026 = vadd.f32 0.0, %v1025
        %v1027 = vpop.f32.mrb[0].mxu0
        %1028 = vmatprep.mubr.f32.mxu0 0.0
        %1029 = vmatmul.mubr.f32.gmra.mrb[0].mxu0 %v553
        %v1030 = vpop.f32.mrb[0].mxu0
        %v1031 = vadd.f32 0.0, %v1030
        %v1032 = vpop.f32.mrb[0].mxu0
        %1033 = vmatprep.mubr.f32.mxu0 0.0
        %1034 = vmatmul.mubr.f32.gmra.mrb[0].mxu0 %v558
        %v1035 = vpop.f32.mrb[0].mxu0
        %v1036 = vadd.f32 0.0, %v1035
        %v1037 = vpop.f32.mrb[0].mxu0
        %1038 = vmatprep.mubr.f32.mxu0 0.0
        %1039 = vmatmul.mubr.f32.gmra.mrb[0].mxu0 %v563
        %v1040 = vpop.f32.mrb[0].mxu0
        %v1041 = vadd.f32 0.0, %v1040
        %v1042 = vpop.f32.mrb[0].mxu0
        %1043 = vmatprep.mubr.f32.mxu0 0.0
        %1044 = vmatmul.mubr.f32.gmra.mrb[0].mxu0 %v568
        %v1045 = vpop.f32.mrb[0].mxu0
        %v1046 = vadd.f32 0.0, %v1045
        %v1047 = vpop.f32.mrb[0].mxu0
        %1048 = vmatprep.mubr.f32.mxu0 0.0
        %1049 = vmatmul.mubr.f32.gmra.mrb[0].mxu0 %v573
        %v1050 = vpop.f32.mrb[0].mxu0
        %v1051 = vadd.f32 0.0, %v1050
        %v1052 = vpop.f32.mrb[0].mxu0
        %1053 = vmatprep.mubr.f32.mxu0 0.0
        %1054 = vmatmul.mubr.f32.gmra.mrb[0].mxu0 %v578
        %v1055 = vpop.f32.mrb[0].mxu0
        %v1056 = vadd.f32 0.0, %v1055
        %v1057 = vpop.f32.mrb[0].mxu0
        %1058 = vmatprep.mubr.f32.mxu0 0.0
        %1059 = vmatmul.mubr.f32.gmra.mrb[0].mxu0 %v583
        %v1060 = vpop.f32.mrb[0].mxu0
        %v1061 = vadd.f32 0.0, %v1060
        %v1062 = vpop.f32.mrb[0].mxu0
        %1063 = vmatprep.mubr.f32.mxu0 0.0
        %1064 = vmatmul.mubr.f32.gmra.mrb[0].mxu0 %v588
        %v1065 = vpop.f32.mrb[0].mxu0
        %v1066 = vadd.f32 0.0, %v1065
        %v1067 = vpop.f32.mrb[0].mxu0
        %1068 = vmatprep.mubr.f32.mxu0 0.0
        %1069 = vmatmul.mubr.f32.gmra.mrb[0].mxu0 %v593
        %v1070 = vpop.f32.mrb[0].mxu0
        %v1071 = vadd.f32 0.0, %v1070
        %v1072 = vpop.f32.mrb[0].mxu0
        %1073 = vmatprep.mubr.f32.mxu0 0.0
        %1074 = vmatmul.mubr.f32.gmra.mrb[0].mxu0 %v598
        %v1075 = vpop.f32.mrb[0].mxu0
        %v1076 = vadd.f32 0.0, %v1075
        %v1077 = vpop.f32.mrb[0].mxu0
        %1078 = vmatprep.mubr.f32.mxu0 0.0
        %1079 = vmatmul.mubr.f32.gmra.mrb[0].mxu0 %v603
        %v1080 = vpop.f32.mrb[0].mxu0
        %v1081 = vadd.f32 0.0, %v1080
        %v1082 = vpop.f32.mrb[0].mxu0
        %1083 = vmatprep.mubr.f32.mxu0 0.0
        %1084 = vmatmul.mubr.f32.gmra.mrb[0].mxu0 %v608
        %v1085 = vpop.f32.mrb[0].mxu0
        %v1086 = vadd.f32 0.0, %v1085
        %v1087 = vpop.f32.mrb[0].mxu0
        %1088 = vmatprep.mubr.f32.mxu0 0.0
        %1089 = vmatmul.mubr.f32.gmra.mrb[0].mxu0 %v613
        %v1090 = vpop.f32.mrb[0].mxu0
        %v1091 = vadd.f32 0.0, %v1090
        %v1092 = vpop.f32.mrb[0].mxu0
        %1093 = vmatprep.mubr.f32.mxu0 0.0
        %1094 = vmatmul.mubr.f32.gmra.mrb[0].mxu0 %v618
        %v1095 = vpop.f32.mrb[0].mxu0
        %v1096 = vadd.f32 0.0, %v1095
        %v1097 = vpop.f32.mrb[0].mxu0
        %1098 = vmatprep.mubr.f32.mxu0 0.0
        %1099 = vmatmul.mubr.f32.gmra.mrb[0].mxu0 %v623
        %v1100 = vpop.f32.mrb[0].mxu0
        %v1101 = vadd.f32 0.0, %v1100
        %v1102 = vpop.f32.mrb[0].mxu0
        %1103 = vmatprep.mubr.f32.mxu0 0.0
        %1104 = vmatmul.mubr.f32.gmra.mrb[0].mxu0 %v628
        %v1105 = vpop.f32.mrb[0].mxu0
        %v1106 = vadd.f32 0.0, %v1105
        %v1107 = vpop.f32.mrb[0].mxu0
        %1108 = vmatprep.mubr.f32.mxu0 0.0
        %1109 = vmatmul.mubr.f32.gmra.mrb[0].mxu0 %v633
        %v1110 = vpop.f32.mrb[0].mxu0
        %v1111 = vadd.f32 0.0, %v1110
        %v1112 = vpop.f32.mrb[0].mxu0
        %1113 = vmatprep.mubr.f32.mxu0 0.0
        %1114 = vmatmul.mubr.f32.gmra.mrb[0].mxu0 %v638
        %v1115 = vpop.f32.mrb[0].mxu0
        %v1116 = vadd.f32 0.0, %v1115
        %v1117 = vpop.f32.mrb[0].mxu0
        %1118 = vmatprep.mubr.f32.mxu0 0.0
        %1119 = vmatmul.mubr.f32.gmra.mrb[0].mxu0 %v643
        %v1120 = vpop.f32.mrb[0].mxu0
        %v1121 = vadd.f32 0.0, %v1120
        %v1122 = vpop.f32.mrb[0].mxu0
        %1123 = vmatprep.mubr.f32.mxu0 0.0
        %1124 = vmatmul.mubr.f32.gmra.mrb[0].mxu0 %v648
        %v1125 = vpop.f32.mrb[0].mxu0
        %v1126 = vadd.f32 0.0, %v1125
        %v1127 = vpop.f32.mrb[0].mxu0
        %1128 = vmatprep.mubr.f32.mxu0 0.0
        %1129 = vmatmul.mubr.f32.gmra.mrb[0].mxu0 %v653
        %v1130 = vpop.f32.mrb[0].mxu0
        %v1131 = vadd.f32 0.0, %v1130
        %v1132 = vpop.f32.mrb[0].mxu0
        %1133 = vmatprep.mubr.f32.mxu0 0.0
        %1134 = vmatmul.mubr.f32.gmra.mrb[0].mxu0 %v658
        %v1135 = vpop.f32.mrb[0].mxu0
        %v1136 = vadd.f32 0.0, %v1135
        %v1137 = vpop.f32.mrb[0].mxu0
        %1138 = vmatprep.mubr.f32.mxu0 0.0
        %1139 = vmatmul.mubr.f32.gmra.mrb[0].mxu0 %v663
        %v1140 = vpop.f32.mrb[0].mxu0
        %v1141 = vadd.f32 0.0, %v1140
        %v1142 = vpop.f32.mrb[0].mxu0
        %1143 = vdwg.mxu0
        %vm1144 = vcmask 31744
        %1145 = vst.msk [vmem:[%s309] sm:$0xff] %vm1144, %v986
        %1146 = vst.msk [vmem:[%s309 + $0x8] sm:$0xff] %vm1144, %v991
        %1147 = vst.msk [vmem:[%s309 + $0x10] sm:$0xff] %vm1144, %v996
        %1148 = vst.msk [vmem:[%s309 + $0x18] sm:$0xff] %vm1144, %v1001
        %1149 = vst.msk [vmem:[%s309 + $0x20] sm:$0xff] %vm1144, %v1006
        %1150 = vst.msk [vmem:[%s309 + $0x28] sm:$0xff] %vm1144, %v1011
        %1151 = vst.msk [vmem:[%s309 + $0x30] sm:$0xff] %vm1144, %v1016
        %1152 = vst.msk [vmem:[%s309 + $0x38] sm:$0xff] %vm1144, %v1021
        %1153 = vst.msk [vmem:[%s309 + $0x40] sm:$0xff] %vm1144, %v1026
        %1154 = vst.msk [vmem:[%s309 + $0x48] sm:$0xff] %vm1144, %v1031
        %1155 = vst.msk [vmem:[%s309 + $0x50] sm:$0xff] %vm1144, %v1036
        %1156 = vst.msk [vmem:[%s309 + $0x58] sm:$0xff] %vm1144, %v1041
        %1157 = vst.msk [vmem:[%s309 + $0x60] sm:$0xff] %vm1144, %v1046
        %1158 = vst.msk [vmem:[%s309 + $0x68] sm:$0xff] %vm1144, %v1051
        %1159 = vst.msk [vmem:[%s309 + $0x70] sm:$0xff] %vm1144, %v1056
        %1160 = vst.msk [vmem:[%s309 + $0x78] sm:$0xff] %vm1144, %v1061
        %1161 = vst.msk [vmem:[%s309 + $0x80] sm:$0xff] %vm1144, %v1066
        %1162 = vst.msk [vmem:[%s309 + $0x88] sm:$0xff] %vm1144, %v1071
        %1163 = vst.msk [vmem:[%s309 + $0x90] sm:$0xff] %vm1144, %v1076
        %1164 = vst.msk [vmem:[%s309 + $0x98] sm:$0xff] %vm1144, %v1081
        %1165 = vst.msk [vmem:[%s309 + $0xa0] sm:$0xff] %vm1144, %v1086
        %1166 = vst.msk [vmem:[%s309 + $0xa8] sm:$0xff] %vm1144, %v1091
        %1167 = vst.msk [vmem:[%s309 + $0xb0] sm:$0xff] %vm1144, %v1096
        %1168 = vst.msk [vmem:[%s309 + $0xb8] sm:$0xff] %vm1144, %v1101
        %1169 = vst.msk [vmem:[%s309 + $0xc0] sm:$0xff] %vm1144, %v1106
        %1170 = vst.msk [vmem:[%s309 + $0xc8] sm:$0xff] %vm1144, %v1111
        %1171 = vst.msk [vmem:[%s309 + $0xd0] sm:$0xff] %vm1144, %v1116
        %1172 = vst.msk [vmem:[%s309 + $0xd8] sm:$0xff] %vm1144, %v1121
        %1173 = vst.msk [vmem:[%s309 + $0xe0] sm:$0xff] %vm1144, %v1126
        %1174 = vst.msk [vmem:[%s309 + $0xe8] sm:$0xff] %vm1144, %v1131
        %1175 = vst.msk [vmem:[%s309 + $0xf0] sm:$0xff] %vm1144, %v1136
        %1176 = vst.msk [vmem:[%s309 + $0xf8] sm:$0xff] %vm1144, %v1141
        %s1177 = sand.u32 %s131, 1
        %s1178 = scalar_lea.sflag [#allocation3], %s1177
        %s1179 = sand.u32 %s131, 1
        %s1180 = smul.addr %s1179, 128
        %s1181 = scalar_lea.vmem [#allocation2], %s1180
        %s1182 = sand.u32 %s157, 1
        %s1183 = scalar_lea.sflag [#allocation5], %s1182
        %s1184 = sand.u32 %s157, 1
        %s1185 = smul.addr %s1184, 8
        %s1186 = scalar_lea.vmem [#allocation4], %s1185
        %p1187 = scmp.lt.s32.totalorder %s24, 2
        %s1188 = scalar_select %p1187, %s24, 2
        %s1189 = smul.addr %s1188, 32
        %s1190 = smul.addr %s1189, 8
        %s1191 = scalar_lea.vmem %s6, %s1190
        // Predicated region
        $region37: #{tpu_custom_call.1} parent=35 // pred_check
          %p1192 = pneg %p141
        $region38: #{tpu_custom_call.1} parent=35 // pred_check_branch
          %1194 = sbr.rel (%p1192) target = $region40
        $region39: #{tpu_custom_call.1} parent=35 // pred_region
          %s1196 = ssub.s32 2048, 2048
          %1197 = vsyncadd %s1178, %s1196
          %s1198 = smul.addr %s24, 32
          %s1199 = smul.addr %s1198, 64
          %s1200 = scalar_lea.hbm %s4, %s1199
          %s1201 = sshll.u32 %s1181, 4
          %s1202 = int_to_ptr.vmem [resolvable:$true] %s1201
          %1207 = dma.vmem_to_hbm [thread:$0]  %s1202, 2048, %s1200, %s1178, 64, 64, 4
        $region40: #{tpu_custom_call.1} parent=35 // pred_fallthru
          _
        // Predicated region
        $region41: #{tpu_custom_call.1} parent=35 // pred_check
          %p1208 = pneg %p167
        $region42: #{tpu_custom_call.1} parent=35 // pred_check_branch
          %1210 = sbr.rel (%p1208) target = $region44
        $region43: #{tpu_custom_call.1} parent=35 // pred_region
          %s1212 = ssub.s32 128, 128
          %1213 = vsyncadd %s1183, %s1212
          %s1214 = smul.addr %s24, 2
          %s1215 = smul.addr %s1214, 64
          %s1216 = scalar_lea.hbm %s5, %s1215
          %s1218 = sshll.u32 %s1186, 4
          %s1219 = int_to_ptr.vmem [resolvable:$true] %s1218
          %1221 = dma.vmem_to_hbm [thread:$0]  %s1219, 128, %s1216, %s1183
        $region44: #{tpu_custom_call.1} parent=35 // pred_fallthru
          _
        // Predicated region
        $region45: #{tpu_custom_call.1} parent=35 // pred_check
          %p1222 = pneg %p193
        $region46: #{tpu_custom_call.1} parent=35 // pred_check_branch
          %1224 = sbr.rel (%p1222) target = $region48
        $region47: #{tpu_custom_call.1} parent=35 // pred_region
          _
        $region48: #{tpu_custom_call.1} parent=35 // pred_fallthru
          _
      $region36: #{tpu_custom_call.1} parent=5 // pred_fallthru
        _
      %p1225 = scmp.le.s32.totalorder 2, %s19
      // Predicated region
      $region49: #{tpu_custom_call.1} parent=5 // pred_check
        %p1226 = pneg %p1225
      $region50: #{tpu_custom_call.1} parent=5 // pred_check_branch
        %1228 = sbr.rel (%p1226) target = $region52
      $region51: #{tpu_custom_call.1} parent=5 // pred_region
        %s1229 = ssub.s32 %s19, 2
        // Predicated region
        $region53: #{tpu_custom_call.1} parent=51 // pred_check
          %p1230 = pneg %p147
        $region54: #{tpu_custom_call.1} parent=51 // pred_check_branch
          %1232 = sbr.rel (%p1230) target = $region56
        $region55: #{tpu_custom_call.1} parent=51 // pred_region
          %s1233 = sand.u32 %s132, 1
          %s1234 = scalar_lea.sflag [#allocation3], %s1233
          %s1235 = sand.u32 %s132, 1
          %s1236 = smul.addr %s1235, 128
          %s1237 = scalar_lea.vmem [#allocation2], %s1236
          %1238 = dma.done %s1234, 2048
        $region56: #{tpu_custom_call.1} parent=51 // pred_fallthru
          _
        // Predicated region
        $region57: #{tpu_custom_call.1} parent=51 // pred_check
          %p1239 = pneg %p173
        $region58: #{tpu_custom_call.1} parent=51 // pred_check_branch
          %1241 = sbr.rel (%p1239) target = $region60
        $region59: #{tpu_custom_call.1} parent=51 // pred_region
          %s1242 = sand.u32 %s158, 1
          %s1243 = scalar_lea.sflag [#allocation5], %s1242
          %s1244 = sand.u32 %s158, 1
          %s1245 = smul.addr %s1244, 8
          %s1246 = scalar_lea.vmem [#allocation4], %s1245
          %1247 = dma.done %s1243, 128
        $region60: #{tpu_custom_call.1} parent=51 // pred_fallthru
          _
        // Predicated region
        $region61: #{tpu_custom_call.1} parent=51 // pred_check
          %p1248 = pneg %p199
        $region62: #{tpu_custom_call.1} parent=51 // pred_check_branch
          %1250 = sbr.rel (%p1248) target = $region64
        $region63: #{tpu_custom_call.1} parent=51 // pred_region
          %p1251 = scmp.lt.s32.totalorder %s25, 2
          %s1252 = scalar_select %p1251, %s25, 2
          %s1253 = smul.addr %s1252, 32
          %s1254 = smul.addr %s1253, 8
          %s1255 = scalar_lea.vmem %s6, %s1254
        $region64: #{tpu_custom_call.1} parent=51 // pred_fallthru
          _
      $region52: #{tpu_custom_call.1} parent=5 // pred_fallthru
        _
    $region6: #{tpu_custom_call.1} parent=1 // loop_footer
      %s23 = sadd.s32 1, %s19
    $region7: #{tpu_custom_call.1} parent=1 // loop_footer_branch
      %18 = sbr.rel target = $region3
    $region8: #{tpu_custom_call.1} parent=1 // loop_exit
      _
    %1256 = vsyncpa [#allocation3], 1
    %s1257 = scalar_lea.sflag [#allocation3], 1
    %1258 = vsyncpa %s1257, 1
    %1259 = vsyncpa [#allocation5], 1
    %s1260 = scalar_lea.sflag [#allocation5], 1
    %1261 = vsyncpa %s1260, 1

</llo_original>
